<compile_context>
chip_gen: v6e
topology: v6e:2x2x1
jax: 0.10.0
libtpu: 0.0.40
codegen_flags: <defaults>
</compile_context>

<pallas_src>
import jax
import jax.numpy as jnp
from jax.experimental import pallas as pl
from jax.experimental.pallas import tpu as pltpu


def _round_up(x, m):
    return ((x + m - 1) // m) * m


# ---------------------------------------------------------------------------
# Pallas kernel: lane-dense gating of x_high, tiled over (N*C, H*W).
# ---------------------------------------------------------------------------
def _apply_gate_kernel(x_ref, g_ref, o_ref):
    # x_ref: (tr, tc) tile of x_high viewed as (N*C, H*W)
    # g_ref: (tr, 1)  per-row gate (f32) -> lane-broadcast multiply on the VPU
    # o_ref: (tr, tc)
    o_ref[...] = (x_ref[...] * g_ref[...]).astype(o_ref.dtype)


# ---------------------------------------------------------------------------
# Wrapper
# ---------------------------------------------------------------------------
def sle_block(x_low, x_high, w1_oihw, w2_oihw, *, donate_x_high=False):
    """SLEBlock forward. x_low: (N,Cin,Hl,Wl), x_high: (N,Cout,Hh,Wh),
    w1: (Cout,Cin,4,4), w2: (Cout,Cout,1,1). Returns (N,Cout,Hh,Wh)."""
    N, cin, Hl, Wl = x_low.shape
    Nh, cout, Hh, Wh = x_high.shape
    assert N == Nh
    assert w1_oihw.shape == (cout, cin, 4, 4)
    assert w2_oihw.shape == (cout, cout, 1, 1)
    assert Hl % 4 == 0 and Wl % 4 == 0, "adaptive pool: uniform-block case only"

    # --- Gate: pool + 4x4 conv (full contraction) + Swish + 1x1 conv + sigmoid.
    # Tiny (below one MXU tile) -> plain jnp; XLA fuses it into one small fusion.
    pooled = x_low.reshape(N, cin, 4, Hl // 4, 4, Wl // 4).mean(axis=(3, 5))
    pooled_flat = pooled.reshape(N, cin * 16).astype(jnp.float32)   # k = ci*16+i*4+j
    w1_mat = w1_oihw.reshape(cout, cin * 16).T.astype(jnp.float32)  # (16*cin, cout)
    w2_mat = w2_oihw.reshape(cout, cout).T.astype(jnp.float32)      # (cout, cout)
    h = pooled_flat @ w1_mat
    h = h * jax.nn.sigmoid(h)                                       # Swish
    gate = jax.nn.sigmoid(h @ w2_mat)                               # (N, cout), f32

    # --- Lane-dense view of the heavy tensor.
    rows, cols = N * cout, Hh * Wh
    xh2 = x_high.reshape(rows, cols)          # free row-major reshape
    g2 = gate.reshape(rows, 1)                # per-row gate, kept in f32

    # --- Dtype-aware, (8,128)-legal, VMEM-budgeted tiles.
    itemsize = jnp.dtype(x_high.dtype).itemsize
    sub = {4: 8, 2: 16, 1: 32}.get(itemsize, 8)   # min sublane multiple per dtype
    lane = 128
    budget_bytes = 4 * 1024 * 1024                # ~4 MiB per buffer (v6e/v7x sweet spot)

    tr = min(_round_up(rows, sub), 256)
    tc_cap = max(lane, (budget_bytes // (tr * itemsize)) // lane * lane)
    tc = min(_round_up(cols, lane), tc_cap)

    grid_r, grid_c = pl.cdiv(rows, tr), pl.cdiv(cols, tc)
    # Guarantee >= 2 grid steps along a parallel axis so both v7x TensorCores work.
    if grid_r * grid_c < 2:
        if cols > lane:
            tc = max(lane, _round_up(pl.cdiv(cols, 2), lane))
        elif rows > sub:
            tr = max(sub, _round_up(pl.cdiv(rows, 2), sub))
        grid_r, grid_c = pl.cdiv(rows, tr), pl.cdiv(cols, tc)

    out2 = pl.pallas_call(
        _apply_gate_kernel,
        out_shape=jax.ShapeDtypeStruct((rows, cols), x_high.dtype),
        grid_spec=pltpu.PrefetchScalarGridSpec(
            num_scalar_prefetch=0,
            grid=(grid_r, grid_c),                     # cols innermost: gate re-DMA elided
            in_specs=[pl.BlockSpec((tr, tc), lambda i, j: (i, j)),
                      pl.BlockSpec((tr, 1), lambda i, j: (i, 0))],
            out_specs=pl.BlockSpec((tr, tc), lambda i, j: (i, j))),
        compiler_params=pltpu.CompilerParams(
            dimension_semantics=("parallel", "parallel"),
            # In+out double-buffered 4 MiB tiles + gate << 48 MiB; leaves
            # headroom under v7x's 64 MiB physical VMEM (v5e/v6e have 128 MiB).
            vmem_limit_bytes=48 * 1024 * 1024),
        input_output_aliases=({0: 0} if donate_x_high else {}),
    )(xh2, g2)

    return out2.reshape(N, cout, Hh, Wh)


# ---------------------------------------------------------------------------
# Plain-JAX reference of the PyTorch forward (for verification).
# ---------------------------------------------------------------------------
def reference_forward(x_low, x_high, w1, w2):
    N, cin, Hl, Wl = x_low.shape
    pooled = x_low.reshape(N, cin, 4, Hl // 4, 4, Wl // 4).mean(axis=(3, 5))
    y = jax.lax.conv_general_dilated(
        pooled, w1, window_strides=(1, 1), padding="VALID",
        dimension_numbers=("NCHW", "OIHW", "NCHW"))          # (N,cout,1,1)
    y = y * jax.nn.sigmoid(y)                                # Swish
    y = jax.lax.conv_general_dilated(
        y, w2, window_strides=(1, 1), padding="VALID",
        dimension_numbers=("NCHW", "OIHW", "NCHW"))          # 1x1 conv
    gate = jax.nn.sigmoid(y)                                 # (N,cout,1,1)
    return gate * x_high


if __name__ == "__main__":
    # Small deterministic setup: SLEBlock(chan_in=8, chan_out=4);
    # x_low low-res feature (2,8,16,16), x_high high-res feature (2,4,32,32).
    chan_in, chan_out = 8, 4
    N, Hl, Wl = 2, 16, 16
    Hh, Wh = 32, 32

    key = jax.random.PRNGKey(0)
    k1, k2, k3, k4 = jax.random.split(key, 4)
    x_low = jax.random.normal(k1, (N, chan_in, Hl, Wl), dtype=jnp.float32)
    x_high = jax.random.normal(k2, (N, chan_out, Hh, Wh), dtype=jnp.float32)
    w1 = 0.1 * jax.random.normal(k3, (chan_out, chan_in, 4, 4), dtype=jnp.float32)
    w2 = 0.1 * jax.random.normal(k4, (chan_out, chan_out, 1, 1), dtype=jnp.float32)

    out = jax.block_until_ready(sle_block(x_low, x_high, w1, w2))
    ref = jax.block_until_ready(reference_forward(x_low, x_high, w1, w2))

    assert out.shape == (N, chan_out, Hh, Wh), out.shape
    assert jnp.allclose(out, ref, atol=1e-4, rtol=1e-4), (
        float(jnp.max(jnp.abs(out - ref))))
    print("KERNEL_OK")
</pallas_src>

<mosaic_0001>
module attributes {stable_mosaic.version = 11 : i64} {
  func.func @_apply_gate_kernel(%arg0: i32, %arg1: i32, %arg2: memref<8x512xf32, #tpu.memory_space<vmem>>, %arg3: memref<8x1xf32, #tpu.memory_space<vmem>>, %arg4: memref<8x512xf32, #tpu.memory_space<vmem>>) attributes {dimension_semantics = [#tpu.dimension_semantics<parallel>, #tpu.dimension_semantics<parallel>], iteration_bounds = array<i64: 1, 2>, scalar_prefetch = 0 : i64, scratch_operands = 0 : i64, tpu.core_type = #tpu.core_type<tc>, window_params = [{transform_indices = @transform_0, window_bounds = array<i64: 8, 512>}, {transform_indices = @transform_1, window_bounds = array<i64: 8, 1>}, {transform_indices = @transform_2, window_bounds = array<i64: 8, 512>}]} {
    %c0 = arith.constant 0 : index
    %c0_0 = arith.constant 0 : index
    %0 = vector.load %arg2[%c0, %c0_0] : memref<8x512xf32, #tpu.memory_space<vmem>>, vector<8x512xf32>
    %c0_1 = arith.constant 0 : index
    %c0_2 = arith.constant 0 : index
    %1 = vector.load %arg3[%c0_1, %c0_2] : memref<8x1xf32, #tpu.memory_space<vmem>>, vector<8x1xf32>
    %2 = vector.broadcast %1 : vector<8x1xf32> to vector<8x512xf32>
    %3 = arith.mulf %0, %2 : vector<8x512xf32>
    %c0_3 = arith.constant 0 : index
    %c0_4 = arith.constant 0 : index
    %4 = vector.load %arg4[%c0_3, %c0_4] : memref<8x512xf32, #tpu.memory_space<vmem>>, vector<8x512xf32>
    tpu.vector_store %arg4[%c0_3, %c0_4], %3 {strides = array<i32>} : memref<8x512xf32, #tpu.memory_space<vmem>>, vector<8x512xf32>,
    return
  }
  func.func @transform_0(%arg0: i32, %arg1: i32) -> (i32, i32) {
    %c0_i32 = arith.constant 0 : i32
    return %arg0, %arg1 : i32, i32
  }
  func.func @transform_1(%arg0: i32, %arg1: i32) -> (i32, i32) {
    %c0_i32 = arith.constant 0 : i32
    %c0_i32_0 = arith.constant 0 : i32
    return %arg0, %c0_i32 : i32, i32
  }
  func.func @transform_2(%arg0: i32, %arg1: i32) -> (i32, i32) {
    %c0_i32 = arith.constant 0 : i32
    return %arg0, %arg1 : i32, i32
  }
}

</mosaic_0001>

<llo_original>
// kernel: tpu_custom_call.1
$region0: #{tpu_custom_call.1}
  #allocation0 [shape = 'u32[]', space=smem, size = 0x4, offset = 0x4, fixed_abs, tag = 'smem constant byte address 0x4 - core index']
  #allocation1 [shape = 'u32[144,128]{1,0:T(1,128)}', space=vmem, size = 0x12000, scoped, tag = 'internal scratch']
  %s0 = inlined_call_operand.hbm [shape: f32[8,1024], index: 0, kind: input, shape index: {}]
  %s1 = inlined_call_operand.vmem [shape: f32[8,1], index: 1, kind: input, shape index: {}]
  %s2 = inlined_call_operand.hbm [shape: f32[8,1024], index: 2, kind: output, shape index: {}]
  %s3 = sld [smem:[#allocation0]]
  $region45: #{tpu_custom_call.1} parent=0
    _
  %s5 = ssub.s32 1, %s3
  %s6 = scalar_select 0, %s5, %s3
  $region1: #{tpu_custom_call.1} parent=0
    #allocation2 [shape = 'u8[32768]{0}', space=vmem, size = 0x8000, scoped, tag = 'input window, operand 0']
    #allocation3 [shape = 's32[2]{0}', space=sflag, size = 0x8, scoped, tag = 'scoped memory for tpu_custom_call.1']
    #allocation4 [shape = 's32[2]{0}', space=sflag, size = 0x8, scoped, tag = 'scoped memory for tpu_custom_call.1']
    #allocation5 [shape = 'u8[32768]{0}', space=vmem, size = 0x8000, scoped, tag = 'output window, operand 0']
    %7 = vsyncpa [#allocation3], 0
    %s8 = scalar_lea.sflag [#allocation3], 1
    %9 = vsyncpa %s8, 0
    %10 = vsyncpa [#allocation4], 0
    %s11 = scalar_lea.sflag [#allocation4], 1
    %12 = vsyncpa %s11, 0
    loop: start=0, step=1, limit=4
    $region2: #{tpu_custom_call.1} parent=1 // loop_pre_header
      _
    $region3: #{tpu_custom_call.1} parent=1 // loop_header
      %s14 = sphi 0, %s18
      %p15 = scmp.ge.s32.totalorder %s14, 4
      %s21 = sphi 0, %s33
      %s22 = sphi 0, %s29
      %s23 = sphi 0, %s21
      %s24 = sphi 0, %s22
      %s25 = sphi 0, %s23
      %s26 = sphi 0, %s24
      %s38 = sphi 0, %s40
      %s41 = sphi 0, %s38
      %s42 = sphi 0, %s41
      %s58 = sphi 0, %s42
      %s64 = sphi 0, %s66
      %s67 = sphi 0, %s64
      %s68 = sphi 0, %s67
      %s84 = sphi 0, %s68
      %s92 = sphi 0, %s94
      %s95 = sphi 0, %s92
      %s96 = sphi 0, %s95
      %s112 = sphi 0, %s96
    $region4: #{tpu_custom_call.1} parent=1 // loop_header_branch
      %17 = sbr.rel (%p15) target = $region8
    $region5: #{tpu_custom_call.1} parent=1 // loop_body
      %s19 = ssub.s32 %s14, 1
      %s20 = ssub.s32 %s14, 2
      %s27 = sadd.s32 1, %s22
      %p28 = scmp.ge.s32.totalorder %s27, 2
      %s29 = scalar_select %p28, 0, %s27
      %s30 = sadd.s32 1, %s21
      %s31 = scalar_select %p28, %s30, %s21
      %p32 = scmp.ge.s32.totalorder %s31, 1
      %s33 = scalar_select %p32, 0, %s31
      %s34 = ssub.s32 %s21, %s33
      %s35 = ssub.s32 %s22, %s29
      %s36 = sor.u32 %s34, %s35
      %p37 = scmp.eq.s32.totalorder %s36, 0
      %s39 = sadd.s32 %s38, 1
      %s40 = scalar_select %p37, %s38, %s39
      %p43 = pneg %p37
      %p44 = scmp.eq.s32.totalorder %s14, 1
      %p45 = por %p43, %p44
      %p46 = scmp.ne.s32.totalorder %s38, %s41
      %p47 = scmp.eq.s32.totalorder %s14, 0
      %p48 = por %p46, %p47
      %p49 = scmp.ne.s32.totalorder %s38, %s41
      %p50 = scmp.eq.s32.totalorder %s19, 1
      %p51 = por %p49, %p50
      %p52 = scmp.ne.s32.totalorder %s41, %s42
      %p53 = scmp.eq.s32.totalorder %s19, 0
      %p54 = por %p52, %p53
      %p55 = scmp.ne.s32.totalorder %s41, %s42
      %p56 = scmp.eq.s32.totalorder %s20, 1
      %p57 = por %p55, %p56
      %p59 = scmp.ne.s32.totalorder %s42, %s58
      %p60 = scmp.eq.s32.totalorder %s20, 0
      %p61 = por %p59, %p60
      %s62 = ssub.s32 %s21, %s33
      %p63 = scmp.eq.s32.totalorder %s62, 0
      %s65 = sadd.s32 %s64, 1
      %s66 = scalar_select %p63, %s64, %s65
      %p69 = pneg %p63
      %p70 = scmp.eq.s32.totalorder %s14, 1
      %p71 = por %p69, %p70
      %p72 = scmp.ne.s32.totalorder %s64, %s67
      %p73 = scmp.eq.s32.totalorder %s14, 0
      %p74 = por %p72, %p73
      %p75 = scmp.ne.s32.totalorder %s64, %s67
      %p76 = scmp.eq.s32.totalorder %s19, 1
      %p77 = por %p75, %p76
      %p78 = scmp.ne.s32.totalorder %s67, %s68
      %p79 = scmp.eq.s32.totalorder %s19, 0
      %p80 = por %p78, %p79
      %p81 = scmp.ne.s32.totalorder %s67, %s68
      %p82 = scmp.eq.s32.totalorder %s20, 1
      %p83 = por %p81, %p82
      %p85 = scmp.ne.s32.totalorder %s68, %s84
      %p86 = scmp.eq.s32.totalorder %s20, 0
      %p87 = por %p85, %p86
      %s88 = ssub.s32 %s21, %s33
      %s89 = ssub.s32 %s22, %s29
      %s90 = sor.u32 %s88, %s89
      %p91 = scmp.eq.s32.totalorder %s90, 0
      %s93 = sadd.s32 %s92, 1
      %s94 = scalar_select %p91, %s92, %s93
      %p97 = pneg %p91
      %p98 = scmp.eq.s32.totalorder %s14, 1
      %p99 = por %p97, %p98
      %p100 = scmp.ne.s32.totalorder %s92, %s95
      %p101 = scmp.eq.s32.totalorder %s14, 0
      %p102 = por %p100, %p101
      %p103 = scmp.ne.s32.totalorder %s92, %s95
      %p104 = scmp.eq.s32.totalorder %s19, 1
      %p105 = por %p103, %p104
      %p106 = scmp.ne.s32.totalorder %s95, %s96
      %p107 = scmp.eq.s32.totalorder %s19, 0
      %p108 = por %p106, %p107
      %p109 = scmp.ne.s32.totalorder %s95, %s96
      %p110 = scmp.eq.s32.totalorder %s20, 1
      %p111 = por %p109, %p110
      %p113 = scmp.ne.s32.totalorder %s96, %s112
      %p114 = scmp.eq.s32.totalorder %s20, 0
      %p115 = por %p113, %p114
      %p116 = scmp.le.s32.totalorder 1, %s14
      %p117 = scmp.lt.s32.totalorder %s14, 3
      %p118 = pnand %p116, %p117
      %p119 = pneg %p118
      // Predicated region
      $region9: #{tpu_custom_call.1} parent=5 // pred_check
        _
      $region10: #{tpu_custom_call.1} parent=5 // pred_check_branch
        %121 = sbr.rel (%p118) target = $region12
      $region11: #{tpu_custom_call.1} parent=5 // pred_region
        %s122 = ssub.s32 %s14, 1
        // Predicated region
        $region13: #{tpu_custom_call.1} parent=11 // pred_check
          %p123 = pneg %p80
        $region14: #{tpu_custom_call.1} parent=11 // pred_check_branch
          %125 = sbr.rel (%p123) target = $region16
        $region15: #{tpu_custom_call.1} parent=11 // pred_region
          %p126 = scmp.lt.s32.totalorder %s23, 0
          %s127 = scalar_select %p126, %s23, 0
          %s128 = smul.addr %s127, 8
          %s129 = scalar_lea.vmem %s1, %s128
        $region16: #{tpu_custom_call.1} parent=11 // pred_fallthru
          _
      $region12: #{tpu_custom_call.1} parent=5 // pred_fallthru
        _
      %p130 = scmp.lt.s32.totalorder %s14, 2
      // Predicated region
      $region17: #{tpu_custom_call.1} parent=5 // pred_check
        %p131 = pneg %p130
      $region18: #{tpu_custom_call.1} parent=5 // pred_check_branch
        %133 = sbr.rel (%p131) target = $region20
      $region19: #{tpu_custom_call.1} parent=5 // pred_region
        // Predicated region
        $region21: #{tpu_custom_call.1} parent=19 // pred_check
          %p134 = pneg %p48
        $region22: #{tpu_custom_call.1} parent=19 // pred_check_branch
          %136 = sbr.rel (%p134) target = $region24
        $region23: #{tpu_custom_call.1} parent=19 // pred_region
          %s137 = sand.u32 %s38, 1
          %s138 = scalar_lea.sflag [#allocation3], %s137
          %s139 = sand.u32 %s38, 1
          %s140 = smul.addr %s139, 32
          %s141 = scalar_lea.vmem [#allocation2], %s140
          %s142 = smul.u32 4, %s22
          %s144 = ssub.s32 512, 512
          %145 = vsyncadd %s138, %s144
          %s146 = smul.addr %s21, 8
          %s147 = sadd.s32 %s142, %s146
          %s148 = smul.addr %s147, 128
          %s149 = scalar_lea.hbm %s0, %s148
          %s151 = sshll.u32 %s141, 4
          %s152 = int_to_ptr.vmem [resolvable:$true] %s151
          %154 = dma.hbm_to_vmem [thread:$0]  %s149, 512, %s152, %s138
        $region24: #{tpu_custom_call.1} parent=19 // pred_fallthru
          _
      $region20: #{tpu_custom_call.1} parent=5 // pred_fallthru
        _
      %p155 = scmp.le.s32.totalorder 1, %s14
      %p156 = scmp.lt.s32.totalorder %s14, 3
      %p157 = pnand %p155, %p156
      %p158 = pneg %p157
      // Predicated region
      $region25: #{tpu_custom_call.1} parent=5 // pred_check
        _
      $region26: #{tpu_custom_call.1} parent=5 // pred_check_branch
        %160 = sbr.rel (%p157) target = $region28
      $region27: #{tpu_custom_call.1} parent=5 // pred_region
        %s161 = ssub.s32 %s14, 1
        %s162 = sand.u32 %s41, 1
        %s163 = scalar_lea.sflag [#allocation3], %s162
        %s164 = sand.u32 %s41, 1
        %s165 = smul.addr %s164, 32
        %s166 = scalar_lea.vmem [#allocation2], %s165
        // Predicated region
        $region29: #{tpu_custom_call.1} parent=27 // pred_check
          %p167 = pneg %p54
        $region30: #{tpu_custom_call.1} parent=27 // pred_check_branch
          %169 = sbr.rel (%p167) target = $region32
        $region31: #{tpu_custom_call.1} parent=27 // pred_region
          %170 = dma.done %s163, 512
        $region32: #{tpu_custom_call.1} parent=27 // pred_fallthru
          _
        %s171 = sand.u32 %s41, 1
        %s172 = scalar_lea.sflag [#allocation3], %s171
        %s173 = sand.u32 %s41, 1
        %s174 = smul.addr %s173, 32
        %s175 = scalar_lea.vmem [#allocation2], %s174
        %p176 = pneg %p54
        %p177 = pneg %p51
        %p178 = scmp.lt.s32.totalorder %s23, 0
        %s179 = scalar_select %p178, %s23, 0
        %s180 = smul.addr %s179, 8
        %s181 = scalar_lea.vmem %s1, %s180
        %p182 = pneg %p80
        %p183 = pneg %p77
        %p184 = pneg %p108
        %p185 = pneg %p105
        %s186 = sand.u32 %s95, 1
        %s187 = scalar_lea.sflag [#allocation4], %s186
        %s188 = sand.u32 %s95, 1
        %s189 = smul.addr %s188, 32
        %s190 = scalar_lea.vmem [#allocation5], %s189
        %s191 = smul.u32 4, %s24
        %p192 = scmp.lt.s32.totalorder %s23, 0
        %s193 = scalar_select %p192, %s23, 0
        %s194 = smul.addr %s193, 8
        %s195 = scalar_lea.vmem %s1, %s194
        %s196 = smul.u32 4, %s24
        %v197 = vld [vmem:[%s166] sm:$0xff]
        %v198 = vld [vmem:[%s166 + $0x8] sm:$0xff]
        %v199 = vld [vmem:[%s166 + $0x10] sm:$0xff]
        %v200 = vld [vmem:[%s166 + $0x18] sm:$0xff]
        %v201 = vld [vmem:[%s195] sm:$0xff]
        %203 = vset.pattern.permute.xlu0 0
        %204 = vperm.xlu0 %203, %v201
        %v205 = vpop.permute.xlu0 %204
        %v207 = vmul.f32 %v197, %v205
        %v208 = vmul.f32 %v198, %v205
        %v209 = vmul.f32 %v199, %v205
        %v210 = vmul.f32 %v200, %v205
        %211 = vst [vmem:[%s190] sm:$0xff] %v207
        %212 = vst [vmem:[%s190 + $0x8] sm:$0xff] %v208
        %213 = vst [vmem:[%s190 + $0x10] sm:$0xff] %v209
        %214 = vst [vmem:[%s190 + $0x18] sm:$0xff] %v210
        %s215 = sand.u32 %s95, 1
        %s216 = scalar_lea.sflag [#allocation4], %s215
        %s217 = sand.u32 %s95, 1
        %s218 = smul.addr %s217, 32
        %s219 = scalar_lea.vmem [#allocation5], %s218
        // Predicated region
        $region33: #{tpu_custom_call.1} parent=27 // pred_check
          %p220 = pneg %p105
        $region34: #{tpu_custom_call.1} parent=27 // pred_check_branch
          %222 = sbr.rel (%p220) target = $region36
        $region35: #{tpu_custom_call.1} parent=27 // pred_region
          %s223 = smul.u32 4, %s24
          %s225 = ssub.s32 512, 512
          %226 = vsyncadd %s216, %s225
          %s227 = smul.addr %s23, 8
          %s228 = sadd.s32 %s223, %s227
          %s229 = smul.addr %s228, 128
          %s230 = scalar_lea.hbm %s2, %s229
          %s232 = sshll.u32 %s219, 4
          %s233 = int_to_ptr.vmem [resolvable:$true] %s232
          %235 = dma.vmem_to_hbm [thread:$0]  %s233, 512, %s230, %s216
        $region36: #{tpu_custom_call.1} parent=27 // pred_fallthru
          _
      $region28: #{tpu_custom_call.1} parent=5 // pred_fallthru
        _
      %p236 = scmp.le.s32.totalorder 2, %s14
      // Predicated region
      $region37: #{tpu_custom_call.1} parent=5 // pred_check
        %p237 = pneg %p236
      $region38: #{tpu_custom_call.1} parent=5 // pred_check_branch
        %239 = sbr.rel (%p237) target = $region40
      $region39: #{tpu_custom_call.1} parent=5 // pred_region
        %s240 = ssub.s32 %s14, 2
        // Predicated region
        $region41: #{tpu_custom_call.1} parent=39 // pred_check
          %p241 = pneg %p111
        $region42: #{tpu_custom_call.1} parent=39 // pred_check_branch
          %243 = sbr.rel (%p241) target = $region44
        $region43: #{tpu_custom_call.1} parent=39 // pred_region
          %s244 = sand.u32 %s96, 1
          %s245 = scalar_lea.sflag [#allocation4], %s244
          %s246 = sand.u32 %s96, 1
          %s247 = smul.addr %s246, 32
          %s248 = scalar_lea.vmem [#allocation5], %s247
          %249 = dma.done %s245, 512
        $region44: #{tpu_custom_call.1} parent=39 // pred_fallthru
          _
      $region40: #{tpu_custom_call.1} parent=5 // pred_fallthru
        _
    $region6: #{tpu_custom_call.1} parent=1 // loop_footer
      %s18 = sadd.s32 1, %s14
    $region7: #{tpu_custom_call.1} parent=1 // loop_footer_branch
      %13 = sbr.rel target = $region3
    $region8: #{tpu_custom_call.1} parent=1 // loop_exit
      _
    %250 = vsyncpa [#allocation3], 1
    %s251 = scalar_lea.sflag [#allocation3], 1
    %252 = vsyncpa %s251, 1
    %253 = vsyncpa [#allocation4], 1
    %s254 = scalar_lea.sflag [#allocation4], 1
    %255 = vsyncpa %s254, 1

</llo_original>
